<compile_context>
chip_gen: v6e
topology: v6e:2x2x1
jax: 0.10.0
libtpu: 0.0.40
codegen_flags: <defaults>
</compile_context>

<pallas_src>
import functools

import jax
import jax.numpy as jnp
from jax.experimental import pallas as pl
from jax.experimental.pallas import tpu as pltpu


def _classify_kernel(x_ref, w1_ref, w2_ref, all_ref, pooled_ref, *,
                     hw, t_hw, tiles_per_split, mxu_dtype, needs_mask,
                     precision):
    # x_ref:      (1, C_in, t_hw)    current (batch, HW-tile) slab of the input
    # w1_ref:     (C_in, C_in)       first 1x1 conv weight  (rows = out channels)
    # w2_ref:     (C_out, C_in)      second 1x1 conv weight (rows = out channels)
    # all_ref:    (1, C_out, t_hw)   per-pixel logits for this tile (lane-dense)
    # pooled_ref: (1, 1, C_out, 1)   running max, resident across the HW axis
    s = pl.program_id(1)
    t = pl.program_id(2)

    x = x_ref[0].astype(mxu_dtype)                                   # (C_in, t_hw)
    h = jnp.maximum(
        jnp.dot(w1_ref[...], x, preferred_element_type=jnp.float32,
                precision=precision), 0.0)                           # ReLU(conv1)
    y = jnp.dot(w2_ref[...], h.astype(mxu_dtype),
                preferred_element_type=jnp.float32,
                precision=precision)                                 # (C_out, t_hw)

    all_ref[0] = y.astype(all_ref.dtype)

    if needs_mask:
        # Tail tile: lane columns beyond HW hold padding -> exclude from the max.
        col0 = (s * tiles_per_split + t) * t_hw
        col = jax.lax.broadcasted_iota(jnp.int32, y.shape, 1)
        y = jnp.where(col < (hw - col0), y, -jnp.inf)

    @pl.when(t == 0)
    def _():
        pooled_ref[...] = jnp.full(pooled_ref.shape, -jnp.inf, pooled_ref.dtype)

    tile_max = jnp.max(y, axis=1, keepdims=True)                     # (C_out, 1)
    pooled_ref[0, 0] = jnp.maximum(pooled_ref[0, 0],
                                   tile_max.astype(pooled_ref.dtype))


def _vmem_budget():
    """(per-kernel VMEM budget, compiler vmem limit) in bytes, generation-aware."""
    try:
        cap = int(pltpu.get_tpu_info().vmem_capacity_bytes)
    except Exception:
        cap = 64 * 1024 * 1024          # conservative (v7x-sized) fallback
    budget = max(16 << 20, min(int(cap * 0.70), 100 << 20))   # ~45 MiB v7x, ~90 MiB v6e
    limit = max(budget, min(int(cap * 0.75), 112 << 20))
    return budget, limit


def _pick_hw_tile(hw, c_in, c_out, budget, itemsize=4, cap=8192):
    """Largest multiple-of-128 HW tile whose per-step footprint fits the budget."""
    hw_pad = -(-hw // 128) * 128
    weights = 2 * itemsize * (c_in * c_in + c_out * c_in)       # double-buffered
    per_col = itemsize * (2 * c_in + 2 * c_out                  # x / all_out blocks x2
                          + 2 * (c_in + c_out))                 # h, y + temporaries
    avail = budget - weights - (2 << 20)                        # misc headroom
    t_hw = (max(avail, 0) // per_col) // 128 * 128
    return int(max(128, min(t_hw, cap, hw_pad)))


def classify_conv_forward(feature_nchw, w1_conv, w2_conv, *, hw_tile=None,
                          mxu_dtype=None, all_out_dtype=jnp.float32,
                          precision=None):
    """feature_nchw: (B, C_in, H, W); conv weights in PyTorch layout
    (out_ch, in_ch, 1, 1).  Returns (out, all_out) like phase='train'."""
    B, C_in, H, W = feature_nchw.shape
    HW = H * W
    C_out = w2_conv.shape[0]

    budget, vmem_limit = _vmem_budget()
    if hw_tile is None:
        t_hw = _pick_hw_tile(HW, C_in, C_out, budget)
    else:
        t_hw = max(128, -(-int(hw_tile) // 128) * 128)
        t_hw = min(t_hw, -(-HW // 128) * 128)

    n_t = -(-HW // t_hw)                                  # cdiv: robust tail
    # Expose 2-TensorCore (v7x) parallelism when B == 1 would idle a core.
    n_split = 2 if (B == 1 and n_t >= 2 and n_t % 2 == 0) else 1
    tiles_per_split = n_t // n_split
    needs_mask = (HW % t_hw) != 0

    if mxu_dtype is None:
        # HBM-bound for small channel counts; bf16 MXU only pays off when wide.
        mxu_dtype = jnp.bfloat16 if C_in >= 256 else feature_nchw.dtype

    # Free reshapes only -- no transposes, no extra HBM passes.
    x = feature_nchw.reshape(B, C_in, HW)                 # (B, C_in, HW)
    w1 = w1_conv[:, :, 0, 0].astype(mxu_dtype)            # (C_in, C_in)
    w2 = w2_conv[:, :, 0, 0].astype(mxu_dtype)            # (C_out, C_in)

    kernel = functools.partial(
        _classify_kernel, hw=HW, t_hw=t_hw, tiles_per_split=tiles_per_split,
        mxu_dtype=mxu_dtype, needs_mask=needs_mask, precision=precision)

    cost = pl.CostEstimate(
        flops=2 * B * HW * C_in * (C_in + C_out),
        transcendentals=0,
        bytes_accessed=(4 * B * HW * (C_in + C_out) + 4 * B * C_out
                        + 4 * (C_in * C_in + C_out * C_in)))

    all_out, pooled = pl.pallas_call(
        kernel,
        out_shape=(
            jax.ShapeDtypeStruct((B, C_out, HW), all_out_dtype),
            jax.ShapeDtypeStruct((n_split, B, C_out, 1), jnp.float32),
        ),
        grid_spec=pltpu.PrefetchScalarGridSpec(
            num_scalar_prefetch=0,
            grid=(B, n_split, tiles_per_split),
            in_specs=[
                pl.BlockSpec((1, C_in, t_hw),
                             lambda b, s, t: (b, 0, s * tiles_per_split + t)),
                pl.BlockSpec((C_in, C_in), lambda b, s, t: (0, 0)),
                pl.BlockSpec((C_out, C_in), lambda b, s, t: (0, 0)),
            ],
            out_specs=[
                pl.BlockSpec((1, C_out, t_hw),
                             lambda b, s, t: (b, 0, s * tiles_per_split + t)),
                pl.BlockSpec((1, 1, C_out, 1), lambda b, s, t: (s, b, 0, 0)),
            ],
        ),
        compiler_params=pltpu.CompilerParams(
            dimension_semantics=("parallel", "parallel", "arbitrary"),
            vmem_limit_bytes=int(vmem_limit),
        ),
        cost_estimate=cost,
    )(x, w1, w2)

    out = jnp.max(pooled, axis=0).reshape(B, C_out)       # combine split partials
    return out, all_out                                    # == PyTorch (out, all_out)


def _reference(feature_nchw, w1_conv, w2_conv):
    """Pure-JAX reference of the PyTorch forward (phase='train')."""
    B, C_in, H, W = feature_nchw.shape
    w1 = w1_conv[:, :, 0, 0]
    w2 = w2_conv[:, :, 0, 0]
    h = jnp.maximum(jnp.einsum("oi,bihw->bohw", w1, feature_nchw), 0.0)
    y = jnp.einsum("oi,bihw->bohw", w2, h)
    all_out = y.reshape(B, w2.shape[0], H * W)
    out = jnp.max(all_out, axis=-1)
    return out, all_out


if __name__ == "__main__":
    key = jax.random.PRNGKey(0)
    k_x, k_w1, k_w2 = jax.random.split(key, 3)

    def check(B, C_in, C_out, H, W, **kw):
        feat = jax.random.normal(k_x, (B, C_in, H, W), dtype=jnp.float32)
        w1 = jax.random.normal(k_w1, (C_in, C_in, 1, 1), dtype=jnp.float32) * 0.1
        w2 = jax.random.normal(k_w2, (C_out, C_in, 1, 1), dtype=jnp.float32) * 0.1
        out, all_out = classify_conv_forward(feat, w1, w2, **kw)
        out = jax.block_until_ready(out)
        all_out = jax.block_until_ready(all_out)
        out_r, all_r = _reference(feat, w1, w2)
        assert out.shape == (B, C_out)
        assert all_out.shape == (B, C_out, H * W)
        assert jnp.allclose(out, out_r, atol=1e-4, rtol=1e-4)
        assert jnp.allclose(all_out, all_r, atol=1e-4, rtol=1e-4)

    # Multi HW-tile running max, B-parallel path (grid (2,1,2)).
    check(2, 4, 8, 16, 16, hw_tile=128)
    # B == 1: exercises the 2-way parallel HW split (grid (1,2,1)).
    check(1, 4, 8, 16, 16, hw_tile=64)
    # HW = 100 (not a multiple of 128): exercises the masked-tail path.
    check(1, 8, 16, 10, 10)

    print("KERNEL_OK")
</pallas_src>

<mosaic_0001>
module attributes {stable_mosaic.version = 11 : i64} {
  func.func @_classify_kernel(%arg0: i32, %arg1: i32, %arg2: i32, %arg3: memref<1x4x128xf32, #tpu.memory_space<vmem>>, %arg4: memref<4x4xf32, #tpu.memory_space<vmem>>, %arg5: memref<8x4xf32, #tpu.memory_space<vmem>>, %arg6: memref<1x8x128xf32, #tpu.memory_space<vmem>>, %arg7: memref<1x1x8x1xf32, #tpu.memory_space<vmem>>) attributes {dimension_semantics = [#tpu.dimension_semantics<parallel>, #tpu.dimension_semantics<parallel>, #tpu.dimension_semantics<arbitrary>], iteration_bounds = array<i64: 2, 1, 2>, scalar_prefetch = 0 : i64, scratch_operands = 0 : i64, tpu.core_type = #tpu.core_type<tc>, window_params = [{transform_indices = @transform_0, window_bounds = array<i64: 1, 4, 128>}, {pipeline_mode = #tpu.pipeline_mode<synchronous>, transform_indices = @transform_1, window_bounds = array<i64: 4, 4>}, {pipeline_mode = #tpu.pipeline_mode<synchronous>, transform_indices = @transform_2, window_bounds = array<i64: 8, 4>}, {transform_indices = @transform_3, window_bounds = array<i64: 1, 8, 128>}, {transform_indices = @transform_4, window_bounds = array<i64: 1, 1, 8, 1>}]} {
    %c0 = arith.constant 0 : index
    %c0_0 = arith.constant 0 : index
    %c0_1 = arith.constant 0 : index
    %0 = vector.load %arg3[%c0, %c0_0, %c0_1] : memref<1x4x128xf32, #tpu.memory_space<vmem>>, vector<1x4x128xf32>
    %1 = vector.shape_cast %0 : vector<1x4x128xf32> to vector<4x128xf32>
    %c0_2 = arith.constant 0 : index
    %c0_3 = arith.constant 0 : index
    %2 = vector.load %arg4[%c0_2, %c0_3] : memref<4x4xf32, #tpu.memory_space<vmem>>, vector<4x4xf32>
    %cst = arith.constant dense<0.000000e+00> : vector<4x128xf32>
    %3 = tpu.matmul %2, %1, %cst {dimension_numbers = #tpu.dot_dimension_numbers<[1], [0], [0], [1], [0, 0, 1, 1], [], []>} : vector<4x4xf32>, vector<4x128xf32>, vector<4x128xf32> -> vector<4x128xf32>
    %cst_4 = arith.constant 0.000000e+00 : f32
    %4 = vector.broadcast %cst_4 : f32 to vector<4x128xf32>
    %5 = arith.maximumf %3, %4 : vector<4x128xf32>
    %c0_5 = arith.constant 0 : index
    %c0_6 = arith.constant 0 : index
    %6 = vector.load %arg5[%c0_5, %c0_6] : memref<8x4xf32, #tpu.memory_space<vmem>>, vector<8x4xf32>
    %cst_7 = arith.constant dense<0.000000e+00> : vector<8x128xf32>
    %7 = tpu.matmul %6, %5, %cst_7 {dimension_numbers = #tpu.dot_dimension_numbers<[1], [0], [0], [1], [0, 0, 1, 1], [], []>} : vector<8x4xf32>, vector<4x128xf32>, vector<8x128xf32> -> vector<8x128xf32>
    %c0_8 = arith.constant 0 : index
    %c0_9 = arith.constant 0 : index
    %c0_10 = arith.constant 0 : index
    %8 = vector.load %arg6[%c0_8, %c0_9, %c0_10] : memref<1x8x128xf32, #tpu.memory_space<vmem>>, vector<1x8x128xf32>
    %9 = vector.shape_cast %8 : vector<1x8x128xf32> to vector<8x128xf32>
    %10 = vector.shape_cast %7 : vector<8x128xf32> to vector<1x8x128xf32>
    tpu.vector_store %arg6[%c0_8, %c0_9, %c0_10], %10 {strides = array<i32>} : memref<1x8x128xf32, #tpu.memory_space<vmem>>, vector<1x8x128xf32>,
    %c0_i32 = arith.constant 0 : i32
    %11 = arith.cmpi eq, %arg2, %c0_i32 : i32
    %12 = arith.extui %11 : i1 to i32
    %c0_i32_11 = arith.constant 0 : i32
    %13 = arith.cmpi ne, %12, %c0_i32_11 : i32
    scf.if %13 {
      %cst_21 = arith.constant 0xFF800000 : f32
      %22 = vector.broadcast %cst_21 : f32 to vector<1x1x8x1xf32>
      %c0_22 = arith.constant 0 : index
      %c0_23 = arith.constant 0 : index
      %c0_24 = arith.constant 0 : index
      %c0_25 = arith.constant 0 : index
      %23 = vector.load %arg7[%c0_22, %c0_23, %c0_24, %c0_25] : memref<1x1x8x1xf32, #tpu.memory_space<vmem>>, vector<1x1x8x1xf32>
      tpu.vector_store %arg7[%c0_22, %c0_23, %c0_24, %c0_25], %22 {strides = array<i32>} : memref<1x1x8x1xf32, #tpu.memory_space<vmem>>, vector<1x1x8x1xf32>,
    } else {
    }
    %cst_12 = arith.constant dense<0xFF800000> : vector<8xf32>
    %14 = vector.multi_reduction <maximumf>, %7, %cst_12 [1] : vector<8x128xf32> to vector<8xf32>
    %15 = vector.shape_cast %14 : vector<8xf32> to vector<8x1xf32>
    %c0_13 = arith.constant 0 : index
    %c0_14 = arith.constant 0 : index
    %c0_15 = arith.constant 0 : index
    %c0_16 = arith.constant 0 : index
    %16 = vector.load %arg7[%c0_13, %c0_14, %c0_15, %c0_16] : memref<1x1x8x1xf32, #tpu.memory_space<vmem>>, vector<1x1x8x1xf32>
    %17 = vector.shape_cast %16 : vector<1x1x8x1xf32> to vector<8x1xf32>
    %18 = arith.maximumf %17, %15 : vector<8x1xf32>
    %c0_17 = arith.constant 0 : index
    %c0_18 = arith.constant 0 : index
    %c0_19 = arith.constant 0 : index
    %c0_20 = arith.constant 0 : index
    %19 = vector.load %arg7[%c0_17, %c0_18, %c0_19, %c0_20] : memref<1x1x8x1xf32, #tpu.memory_space<vmem>>, vector<1x1x8x1xf32>
    %20 = vector.shape_cast %19 : vector<1x1x8x1xf32> to vector<8x1xf32>
    %21 = vector.shape_cast %18 : vector<8x1xf32> to vector<1x1x8x1xf32>
    tpu.vector_store %arg7[%c0_17, %c0_18, %c0_19, %c0_20], %21 {strides = array<i32>} : memref<1x1x8x1xf32, #tpu.memory_space<vmem>>, vector<1x1x8x1xf32>,
    return
  }
  func.func @transform_0(%arg0: i32, %arg1: i32, %arg2: i32) -> (i32, i32, i32) {
    %c2_i32 = arith.constant 2 : i32
    %0 = arith.muli %arg1, %c2_i32 : i32
    %1 = arith.addi %0, %arg2 : i32
    %c0_i32 = arith.constant 0 : i32
    %c0_i32_0 = arith.constant 0 : i32
    return %arg0, %c0_i32, %1 : i32, i32, i32
  }
  func.func @transform_1(%arg0: i32, %arg1: i32, %arg2: i32) -> (i32, i32) {
    %c0_i32 = arith.constant 0 : i32
    %c0_i32_0 = arith.constant 0 : i32
    %c0_i32_1 = arith.constant 0 : i32
    return %c0_i32, %c0_i32_0 : i32, i32
  }
  func.func @transform_2(%arg0: i32, %arg1: i32, %arg2: i32) -> (i32, i32) {
    %c0_i32 = arith.constant 0 : i32
    %c0_i32_0 = arith.constant 0 : i32
    %c0_i32_1 = arith.constant 0 : i32
    return %c0_i32, %c0_i32_0 : i32, i32
  }
  func.func @transform_3(%arg0: i32, %arg1: i32, %arg2: i32) -> (i32, i32, i32) {
    %c2_i32 = arith.constant 2 : i32
    %0 = arith.muli %arg1, %c2_i32 : i32
    %1 = arith.addi %0, %arg2 : i32
    %c0_i32 = arith.constant 0 : i32
    %c0_i32_0 = arith.constant 0 : i32
    return %arg0, %c0_i32, %1 : i32, i32, i32
  }
  func.func @transform_4(%arg0: i32, %arg1: i32, %arg2: i32) -> (i32, i32, i32, i32) {
    %c0_i32 = arith.constant 0 : i32
    %c0_i32_0 = arith.constant 0 : i32
    %c0_i32_1 = arith.constant 0 : i32
    return %arg1, %arg0, %c0_i32, %c0_i32_0 : i32, i32, i32, i32
  }
}

</mosaic_0001>

<llo_original>
// kernel: tpu_custom_call.1
$region0: #{tpu_custom_call.1}
  #allocation0 [shape = 'u32[]', space=smem, size = 0x4, offset = 0x4, fixed_abs, tag = 'smem constant byte address 0x4 - core index']
  #allocation1 [shape = 'u32[144,128]{1,0:T(1,128)}', space=vmem, size = 0x12000, scoped, tag = 'internal scratch']
  %s0 = inlined_call_operand.hbm [shape: f32[2,4,256], index: 0, kind: input, shape index: {}]
  %s1 = inlined_call_operand.vmem [shape: f32[4,4], index: 1, kind: input, shape index: {}]
  %s2 = inlined_call_operand.vmem [shape: f32[8,4], index: 2, kind: input, shape index: {}]
  %s3 = inlined_call_operand.hbm [shape: f32[2,8,256], index: 3, kind: output, shape index: {0}]
  %s4 = inlined_call_operand.vmem [shape: f32[1,2,8,1], index: 4, kind: output, shape index: {1}]
  %5 = xla_tuple %s3, %s4
  %s6 = sld [smem:[#allocation0]]
  $region61: #{tpu_custom_call.1} parent=0
    _
  %s8 = ssub.s32 1, %s6
  %s9 = scalar_select 0, %s8, %s6
  $region1: #{tpu_custom_call.1} parent=0
    #allocation2 [shape = 'u8[4096]{0}', space=vmem, size = 0x1000, scoped, tag = 'input window, operand 0']
    #allocation3 [shape = 's32[2]{0}', space=sflag, size = 0x8, scoped, tag = 'scoped memory for tpu_custom_call.1']
    #allocation4 [shape = 's32[2]{0}', space=sflag, size = 0x8, scoped, tag = 'scoped memory for tpu_custom_call.1']
    #allocation5 [shape = 'u8[8192]{0}', space=vmem, size = 0x2000, scoped, tag = 'output window, operand 0']
    %10 = vsyncpa [#allocation3], 0
    %s11 = scalar_lea.sflag [#allocation3], 1
    %12 = vsyncpa %s11, 0
    %13 = vsyncpa [#allocation4], 0
    %s14 = scalar_lea.sflag [#allocation4], 1
    %15 = vsyncpa %s14, 0
    loop: start=0, step=1, limit=6
    $region2: #{tpu_custom_call.1} parent=1 // loop_pre_header
      _
    $region3: #{tpu_custom_call.1} parent=1 // loop_header
      %s17 = sphi 0, %s21
      %p18 = scmp.ge.s32.totalorder %s17, 6
      %s24 = sphi 0, %s43
      %s25 = sphi 0, %s39
      %s26 = sphi 0, %s35
      %s27 = sphi 0, %s24
      %s28 = sphi 0, %s25
      %s29 = sphi 0, %s26
      %s30 = sphi 0, %s27
      %s31 = sphi 0, %s28
      %s32 = sphi 0, %s29
      %s52 = sphi 0, %s54
      %s55 = sphi 0, %s52
      %s56 = sphi 0, %s55
      %s72 = sphi 0, %s56
      %s76 = sphi 0, %s76
      %s78 = sphi 0, %s76
      %s79 = sphi 0, %s78
      %s93 = sphi 0, %s79
      %s97 = sphi 0, %s97
      %s99 = sphi 0, %s97
      %s100 = sphi 0, %s99
      %s114 = sphi 0, %s100
      %s126 = sphi 0, %s128
      %s129 = sphi 0, %s126
      %s130 = sphi 0, %s129
      %s146 = sphi 0, %s130
      %s154 = sphi 0, %s156
      %s157 = sphi 0, %s154
      %s158 = sphi 0, %s157
      %s174 = sphi 0, %s158
    $region4: #{tpu_custom_call.1} parent=1 // loop_header_branch
      %20 = sbr.rel (%p18) target = $region8
    $region5: #{tpu_custom_call.1} parent=1 // loop_body
      %s22 = ssub.s32 %s17, 1
      %s23 = ssub.s32 %s17, 2
      %s33 = sadd.s32 1, %s26
      %p34 = scmp.ge.s32.totalorder %s33, 2
      %s35 = scalar_select %p34, 0, %s33
      %s36 = sadd.s32 1, %s25
      %s37 = scalar_select %p34, %s36, %s25
      %p38 = scmp.ge.s32.totalorder %s37, 1
      %s39 = scalar_select %p38, 0, %s37
      %s40 = sadd.s32 1, %s24
      %s41 = scalar_select %p38, %s40, %s24
      %p42 = scmp.ge.s32.totalorder %s41, 2
      %s43 = scalar_select %p42, 0, %s41
      %s44 = smul.u32 %s25, 2
      %s45 = sadd.s32 %s44, %s26
      %s46 = smul.u32 %s39, 2
      %s47 = sadd.s32 %s46, %s35
      %s48 = ssub.s32 %s24, %s43
      %s49 = ssub.s32 %s45, %s47
      %s50 = sor.u32 %s48, %s49
      %p51 = scmp.eq.s32.totalorder %s50, 0
      %s53 = sadd.s32 %s52, 1
      %s54 = scalar_select %p51, %s52, %s53
      %p57 = pneg %p51
      %p58 = scmp.eq.s32.totalorder %s17, 3
      %p59 = por %p57, %p58
      %p60 = scmp.ne.s32.totalorder %s52, %s55
      %p61 = scmp.eq.s32.totalorder %s17, 0
      %p62 = por %p60, %p61
      %p63 = scmp.ne.s32.totalorder %s52, %s55
      %p64 = scmp.eq.s32.totalorder %s22, 3
      %p65 = por %p63, %p64
      %p66 = scmp.ne.s32.totalorder %s55, %s56
      %p67 = scmp.eq.s32.totalorder %s22, 0
      %p68 = por %p66, %p67
      %p69 = scmp.ne.s32.totalorder %s55, %s56
      %p70 = scmp.eq.s32.totalorder %s23, 3
      %p71 = por %p69, %p70
      %p73 = scmp.ne.s32.totalorder %s56, %s72
      %p74 = scmp.eq.s32.totalorder %s23, 0
      %p75 = por %p73, %p74
      %s77 = sadd.s32 %s76, 1
      %p80 = scmp.eq.s32.totalorder %s17, 3
      %p81 = scmp.ne.s32.totalorder %s76, %s78
      %p82 = scmp.eq.s32.totalorder %s17, 0
      %p83 = por %p81, %p82
      %p84 = scmp.ne.s32.totalorder %s76, %s78
      %p85 = scmp.eq.s32.totalorder %s22, 3
      %p86 = por %p84, %p85
      %p87 = scmp.ne.s32.totalorder %s78, %s79
      %p88 = scmp.eq.s32.totalorder %s22, 0
      %p89 = por %p87, %p88
      %p90 = scmp.ne.s32.totalorder %s78, %s79
      %p91 = scmp.eq.s32.totalorder %s23, 3
      %p92 = por %p90, %p91
      %p94 = scmp.ne.s32.totalorder %s79, %s93
      %p95 = scmp.eq.s32.totalorder %s23, 0
      %p96 = por %p94, %p95
      %s98 = sadd.s32 %s97, 1
      %p101 = scmp.eq.s32.totalorder %s17, 3
      %p102 = scmp.ne.s32.totalorder %s97, %s99
      %p103 = scmp.eq.s32.totalorder %s17, 0
      %p104 = por %p102, %p103
      %p105 = scmp.ne.s32.totalorder %s97, %s99
      %p106 = scmp.eq.s32.totalorder %s22, 3
      %p107 = por %p105, %p106
      %p108 = scmp.ne.s32.totalorder %s99, %s100
      %p109 = scmp.eq.s32.totalorder %s22, 0
      %p110 = por %p108, %p109
      %p111 = scmp.ne.s32.totalorder %s99, %s100
      %p112 = scmp.eq.s32.totalorder %s23, 3
      %p113 = por %p111, %p112
      %p115 = scmp.ne.s32.totalorder %s100, %s114
      %p116 = scmp.eq.s32.totalorder %s23, 0
      %p117 = por %p115, %p116
      %s118 = smul.u32 %s25, 2
      %s119 = sadd.s32 %s118, %s26
      %s120 = smul.u32 %s39, 2
      %s121 = sadd.s32 %s120, %s35
      %s122 = ssub.s32 %s24, %s43
      %s123 = ssub.s32 %s119, %s121
      %s124 = sor.u32 %s122, %s123
      %p125 = scmp.eq.s32.totalorder %s124, 0
      %s127 = sadd.s32 %s126, 1
      %s128 = scalar_select %p125, %s126, %s127
      %p131 = pneg %p125
      %p132 = scmp.eq.s32.totalorder %s17, 3
      %p133 = por %p131, %p132
      %p134 = scmp.ne.s32.totalorder %s126, %s129
      %p135 = scmp.eq.s32.totalorder %s17, 0
      %p136 = por %p134, %p135
      %p137 = scmp.ne.s32.totalorder %s126, %s129
      %p138 = scmp.eq.s32.totalorder %s22, 3
      %p139 = por %p137, %p138
      %p140 = scmp.ne.s32.totalorder %s129, %s130
      %p141 = scmp.eq.s32.totalorder %s22, 0
      %p142 = por %p140, %p141
      %p143 = scmp.ne.s32.totalorder %s129, %s130
      %p144 = scmp.eq.s32.totalorder %s23, 3
      %p145 = por %p143, %p144
      %p147 = scmp.ne.s32.totalorder %s130, %s146
      %p148 = scmp.eq.s32.totalorder %s23, 0
      %p149 = por %p147, %p148
      %s150 = ssub.s32 %s25, %s39
      %s151 = ssub.s32 %s24, %s43
      %s152 = sor.u32 %s150, %s151
      %p153 = scmp.eq.s32.totalorder %s152, 0
      %s155 = sadd.s32 %s154, 1
      %s156 = scalar_select %p153, %s154, %s155
      %p159 = pneg %p153
      %p160 = scmp.eq.s32.totalorder %s17, 3
      %p161 = por %p159, %p160
      %p162 = scmp.ne.s32.totalorder %s154, %s157
      %p163 = scmp.eq.s32.totalorder %s17, 0
      %p164 = por %p162, %p163
      %p165 = scmp.ne.s32.totalorder %s154, %s157
      %p166 = scmp.eq.s32.totalorder %s22, 3
      %p167 = por %p165, %p166
      %p168 = scmp.ne.s32.totalorder %s157, %s158
      %p169 = scmp.eq.s32.totalorder %s22, 0
      %p170 = por %p168, %p169
      %p171 = scmp.ne.s32.totalorder %s157, %s158
      %p172 = scmp.eq.s32.totalorder %s23, 3
      %p173 = por %p171, %p172
      %p175 = scmp.ne.s32.totalorder %s158, %s174
      %p176 = scmp.eq.s32.totalorder %s23, 0
      %p177 = por %p175, %p176
      %p178 = scmp.le.s32.totalorder 1, %s17
      %p179 = scmp.lt.s32.totalorder %s17, 5
      %p180 = pnand %p178, %p179
      %p181 = pneg %p180
      // Predicated region
      $region9: #{tpu_custom_call.1} parent=5 // pred_check
        _
      $region10: #{tpu_custom_call.1} parent=5 // pred_check_branch
        %183 = sbr.rel (%p180) target = $region12
      $region11: #{tpu_custom_call.1} parent=5 // pred_region
        %s184 = ssub.s32 %s17, 1
        // Predicated region
        $region13: #{tpu_custom_call.1} parent=11 // pred_check
          %p185 = pneg %p89
        $region14: #{tpu_custom_call.1} parent=11 // pred_check_branch
          %187 = sbr.rel (%p185) target = $region16
        $region15: #{tpu_custom_call.1} parent=11 // pred_region
          _
        $region16: #{tpu_custom_call.1} parent=11 // pred_fallthru
          _
        // Predicated region
        $region17: #{tpu_custom_call.1} parent=11 // pred_check
          %p188 = pneg %p110
        $region18: #{tpu_custom_call.1} parent=11 // pred_check_branch
          %190 = sbr.rel (%p188) target = $region20
        $region19: #{tpu_custom_call.1} parent=11 // pred_region
          _
        $region20: #{tpu_custom_call.1} parent=11 // pred_fallthru
          _
      $region12: #{tpu_custom_call.1} parent=5 // pred_fallthru
        _
      %p191 = scmp.lt.s32.totalorder %s17, 4
      // Predicated region
      $region21: #{tpu_custom_call.1} parent=5 // pred_check
        %p192 = pneg %p191
      $region22: #{tpu_custom_call.1} parent=5 // pred_check_branch
        %194 = sbr.rel (%p192) target = $region24
      $region23: #{tpu_custom_call.1} parent=5 // pred_region
        // Predicated region
        $region25: #{tpu_custom_call.1} parent=23 // pred_check
          %p195 = pneg %p62
        $region26: #{tpu_custom_call.1} parent=23 // pred_check_branch
          %197 = sbr.rel (%p195) target = $region28
        $region27: #{tpu_custom_call.1} parent=23 // pred_region
          %s198 = sand.u32 %s52, 1
          %s199 = scalar_lea.sflag [#allocation3], %s198
          %s200 = sand.u32 %s52, 1
          %s201 = smul.addr %s200, 4
          %s202 = scalar_lea.vmem [#allocation2], %s201
          %s203 = smul.u32 %s25, 2
          %s204 = sadd.s32 %s203, %s26
          %s206 = ssub.s32 64, 64
          %207 = vsyncadd %s199, %s206
          %s208 = smul.addr %s24, 2
          %s209 = sadd.s32 %s204, %s208
          %s210 = smul.addr %s209, 64
          %s211 = scalar_lea.hbm %s0, %s210
          %s213 = sshll.u32 %s202, 4
          %s214 = int_to_ptr.vmem [resolvable:$true] %s213
          %216 = dma.hbm_to_vmem [thread:$0]  %s211, 64, %s214, %s199
        $region28: #{tpu_custom_call.1} parent=23 // pred_fallthru
          _
      $region24: #{tpu_custom_call.1} parent=5 // pred_fallthru
        _
      %p217 = scmp.le.s32.totalorder 1, %s17
      %p218 = scmp.lt.s32.totalorder %s17, 5
      %p219 = pnand %p217, %p218
      %p220 = pneg %p219
      // Predicated region
      $region29: #{tpu_custom_call.1} parent=5 // pred_check
        _
      $region30: #{tpu_custom_call.1} parent=5 // pred_check_branch
        %222 = sbr.rel (%p219) target = $region32
      $region31: #{tpu_custom_call.1} parent=5 // pred_region
        %s223 = ssub.s32 %s17, 1
        %s224 = sand.u32 %s55, 1
        %s225 = scalar_lea.sflag [#allocation3], %s224
        %s226 = sand.u32 %s55, 1
        %s227 = smul.addr %s226, 4
        %s228 = scalar_lea.vmem [#allocation2], %s227
        // Predicated region
        $region33: #{tpu_custom_call.1} parent=31 // pred_check
          %p229 = pneg %p68
        $region34: #{tpu_custom_call.1} parent=31 // pred_check_branch
          %231 = sbr.rel (%p229) target = $region36
        $region35: #{tpu_custom_call.1} parent=31 // pred_region
          %232 = dma.done %s225, 64
        $region36: #{tpu_custom_call.1} parent=31 // pred_fallthru
          _
        %s233 = sand.u32 %s55, 1
        %s234 = scalar_lea.sflag [#allocation3], %s233
        %s235 = sand.u32 %s55, 1
        %s236 = smul.addr %s235, 4
        %s237 = scalar_lea.vmem [#allocation2], %s236
        %p238 = pneg %p68
        %p239 = pneg %p65
        %p240 = pneg %p89
        %p241 = pneg %p86
        %p242 = pneg %p110
        %p243 = pneg %p107
        %p244 = pneg %p142
        %p245 = pneg %p139
        %s246 = sand.u32 %s129, 1
        %s247 = scalar_lea.sflag [#allocation4], %s246
        %s248 = sand.u32 %s129, 1
        %s249 = smul.addr %s248, 8
        %s250 = scalar_lea.vmem [#allocation5], %s249
        %p251 = pneg %p170
        %p252 = pneg %p167
        %p253 = scmp.lt.s32.totalorder %s28, 0
        %s254 = scalar_select %p253, %s28, 0
        %p255 = scmp.lt.s32.totalorder %s27, 1
        %s256 = scalar_select %p255, %s27, 1
        %s257 = smul.addr %s254, 2
        %s258 = sadd.s32 %s256, %s257
        %s259 = smul.addr %s258, 8
        %s260 = scalar_lea.vmem %s4, %s259
        %s261 = smul.u32 %s28, 2
        %s262 = sadd.s32 %s261, %s29
        %s263 = smul.u32 %s28, 2
        %s264 = sadd.s32 %s263, %s29
        %p265 = scmp.lt.s32.totalorder %s28, 0
        %s266 = scalar_select %p265, %s28, 0
        %p267 = scmp.lt.s32.totalorder %s27, 1
        %s268 = scalar_select %p267, %s27, 1
        %s269 = smul.addr %s266, 2
        %s270 = sadd.s32 %s268, %s269
        %s271 = smul.addr %s270, 8
        %s272 = scalar_lea.vmem %s4, %s271
        %v273 = vld [vmem:[%s228] sm:$0xf]
        %v274 = vld [vmem:[%s1] sm:$0xf]
        %vm275 = vcmask 31744
        %v277 = vsel %vm275, %v274, 0
        %vm279 = vcmask 1043456
        %v281 = vsel %vm279, %v273, 0
        %283 = vmatprep.subr.mxu0 0.0
        %284 = vmatpush1.msra.mxu0 0.0
        %285 = vmatprep.subr.mxu0 0.0
        %286 = vmatpush1.msra.mxu0 0.0
        %287 = vmatprep.subr.mxu0 0.0
        %288 = vmatpush1.msra.mxu0 0.0
        %289 = vmatprep.subr.mxu0 0.0
        %290 = vmatpush1.msra.mxu0 0.0
        %291 = vmatprep.subr.mxu0 0.0
        %292 = vmatpush1.msra.mxu0 0.0
        %293 = vmatprep.subr.mxu0 0.0
        %294 = vmatpush1.msra.mxu0 0.0
        %295 = vmatprep.subr.mxu0 0.0
        %296 = vmatpush1.msra.mxu0 0.0
        %297 = vmatprep.subr.mxu0 0.0
        %298 = vmatpush1.msra.mxu0 0.0
        %299 = vmatprep.subr.mxu0 0.0
        %300 = vmatpush1.msra.mxu0 0.0
        %301 = vmatprep.subr.mxu0 0.0
        %302 = vmatpush1.msra.mxu0 0.0
        %303 = vmatprep.subr.mxu0 0.0
        %304 = vmatpush1.msra.mxu0 0.0
        %305 = vmatprep.subr.mxu0 0.0
        %306 = vmatpush1.msra.mxu0 0.0
        %307 = vmatprep.subr.mxu0 0.0
        %308 = vmatpush1.msra.mxu0 0.0
        %309 = vmatprep.subr.mxu0 0.0
        %310 = vmatpush1.msra.mxu0 0.0
        %311 = vmatprep.subr.mxu0 0.0
        %312 = vmatpush1.msra.mxu0 0.0
        %313 = vmatprep.subr.mxu0 0.0
        %314 = vmatpush1.msra.mxu0 %v281
        %315 = vmatprep.subr.mxu0 0.0
        %316 = vmatpush2.msra.mxu0 0.0
        %317 = vmatprep.subr.mxu0 0.0
        %318 = vmatpush2.msra.mxu0 0.0
        %319 = vmatprep.subr.mxu0 0.0
        %320 = vmatpush2.msra.mxu0 0.0
        %321 = vmatprep.subr.mxu0 0.0
        %322 = vmatpush2.msra.mxu0 0.0
        %323 = vmatprep.subr.mxu0 0.0
        %324 = vmatpush2.msra.mxu0 0.0
        %325 = vmatprep.subr.mxu0 0.0
        %326 = vmatpush2.msra.mxu0 0.0
        %327 = vmatprep.subr.mxu0 0.0
        %328 = vmatpush2.msra.mxu0 0.0
        %329 = vmatprep.subr.mxu0 0.0
        %330 = vmatpush2.msra.mxu0 0.0
        %331 = vmatprep.subr.mxu0 0.0
        %332 = vmatpush2.msra.mxu0 0.0
        %333 = vmatprep.subr.mxu0 0.0
        %334 = vmatpush2.msra.mxu0 0.0
        %335 = vmatprep.subr.mxu0 0.0
        %336 = vmatpush2.msra.mxu0 0.0
        %337 = vmatprep.subr.mxu0 0.0
        %338 = vmatpush2.msra.mxu0 0.0
        %339 = vmatprep.subr.mxu0 0.0
        %340 = vmatpush2.msra.mxu0 0.0
        %341 = vmatprep.subr.mxu0 0.0
        %342 = vmatpush2.msra.mxu0 0.0
        %343 = vmatprep.subr.mxu0 0.0
        %344 = vmatpush2.msra.mxu0 0.0
        %345 = vmatprep.subr.mxu0 0.0
        %346 = vmatpush2.msra.mxu0 0.0
        %347 = vmatprep.mubr.f32.mxu0 0.0
        %348 = vmatmul.mubr.f32.gmra.mxu0 %v277
        %v349 = vpop.f32.mrf.mxu0
        %v350 = vadd.f32 0.0, %v349
        %v351 = vpop.f32.mrf.mxu0
        %352 = vdwg.mxu0
        %v353 = vmax.f32 %v350, 0.0
        %v354 = vld [vmem:[%s2] sm:$0xff]
        %v356 = vsel %vm275, %v354, 0
        %v359 = vsel %vm279, %v353, 0
        %361 = vmatprep.subr.mxu0 0.0
        %362 = vmatpush1.msra.mxu0 0.0
        %363 = vmatprep.subr.mxu0 0.0
        %364 = vmatpush1.msra.mxu0 0.0
        %365 = vmatprep.subr.mxu0 0.0
        %366 = vmatpush1.msra.mxu0 0.0
        %367 = vmatprep.subr.mxu0 0.0
        %368 = vmatpush1.msra.mxu0 0.0
        %369 = vmatprep.subr.mxu0 0.0
        %370 = vmatpush1.msra.mxu0 0.0
        %371 = vmatprep.subr.mxu0 0.0
        %372 = vmatpush1.msra.mxu0 0.0
        %373 = vmatprep.subr.mxu0 0.0
        %374 = vmatpush1.msra.mxu0 0.0
        %375 = vmatprep.subr.mxu0 0.0
        %376 = vmatpush1.msra.mxu0 0.0
        %377 = vmatprep.subr.mxu0 0.0
        %378 = vmatpush1.msra.mxu0 0.0
        %379 = vmatprep.subr.mxu0 0.0
        %380 = vmatpush1.msra.mxu0 0.0
        %381 = vmatprep.subr.mxu0 0.0
        %382 = vmatpush1.msra.mxu0 0.0
        %383 = vmatprep.subr.mxu0 0.0
        %384 = vmatpush1.msra.mxu0 0.0
        %385 = vmatprep.subr.mxu0 0.0
        %386 = vmatpush1.msra.mxu0 0.0
        %387 = vmatprep.subr.mxu0 0.0
        %388 = vmatpush1.msra.mxu0 0.0
        %389 = vmatprep.subr.mxu0 0.0
        %390 = vmatpush1.msra.mxu0 0.0
        %391 = vmatprep.subr.mxu0 0.0
        %392 = vmatpush1.msra.mxu0 %v359
        %393 = vmatprep.subr.mxu0 0.0
        %394 = vmatpush2.msra.mxu0 0.0
        %395 = vmatprep.subr.mxu0 0.0
        %396 = vmatpush2.msra.mxu0 0.0
        %397 = vmatprep.subr.mxu0 0.0
        %398 = vmatpush2.msra.mxu0 0.0
        %399 = vmatprep.subr.mxu0 0.0
        %400 = vmatpush2.msra.mxu0 0.0
        %401 = vmatprep.subr.mxu0 0.0
        %402 = vmatpush2.msra.mxu0 0.0
        %403 = vmatprep.subr.mxu0 0.0
        %404 = vmatpush2.msra.mxu0 0.0
        %405 = vmatprep.subr.mxu0 0.0
        %406 = vmatpush2.msra.mxu0 0.0
        %407 = vmatprep.subr.mxu0 0.0
        %408 = vmatpush2.msra.mxu0 0.0
        %409 = vmatprep.subr.mxu0 0.0
        %410 = vmatpush2.msra.mxu0 0.0
        %411 = vmatprep.subr.mxu0 0.0
        %412 = vmatpush2.msra.mxu0 0.0
        %413 = vmatprep.subr.mxu0 0.0
        %414 = vmatpush2.msra.mxu0 0.0
        %415 = vmatprep.subr.mxu0 0.0
        %416 = vmatpush2.msra.mxu0 0.0
        %417 = vmatprep.subr.mxu0 0.0
        %418 = vmatpush2.msra.mxu0 0.0
        %419 = vmatprep.subr.mxu0 0.0
        %420 = vmatpush2.msra.mxu0 0.0
        %421 = vmatprep.subr.mxu0 0.0
        %422 = vmatpush2.msra.mxu0 0.0
        %423 = vmatprep.subr.mxu0 0.0
        %424 = vmatpush2.msra.mxu0 0.0
        %425 = vmatprep.mubr.f32.mxu0 0.0
        %426 = vmatmul.mubr.f32.gmra.mxu0 %v356
        %v427 = vpop.f32.mrf.mxu0
        %v428 = vadd.f32 0.0, %v427
        %v429 = vpop.f32.mrf.mxu0
        %430 = vdwg.mxu0
        %431 = vst [vmem:[%s250] sm:$0xff] %v428
        %p432 = scmp.eq.s32.totalorder %s29, 0
        // Predicated region
        $region37: #{tpu_custom_call.1} parent=31 // pred_check
          %p433 = pneg %p432
        $region38: #{tpu_custom_call.1} parent=31 // pred_check_branch
          %435 = sbr.rel (%p433) target = $region40
        $region39: #{tpu_custom_call.1} parent=31 // pred_region
          %vm436 = vcmask 7168
          %437 = vst.msk [vmem:[%s272] sm:$0xff] %vm436, -inf
        $region40: #{tpu_custom_call.1} parent=31 // pred_fallthru
          _
        %438 = vmax.xlane.f32.xlu0 %v428
        %v439 = vpop.xlane.xlu0 %438
        %v440 = vld [vmem:[%s272] sm:$0xff]
        %v441 = vmax.f32 %v440, %v439
        %vm442 = vcmask 7168
        %443 = vst.msk [vmem:[%s272] sm:$0xff] %vm442, %v441
        %s444 = sand.u32 %s129, 1
        %s445 = scalar_lea.sflag [#allocation4], %s444
        %s446 = sand.u32 %s129, 1
        %s447 = smul.addr %s446, 8
        %s448 = scalar_lea.vmem [#allocation5], %s447
        %p449 = scmp.lt.s32.totalorder %s28, 0
        %s450 = scalar_select %p449, %s28, 0
        %p451 = scmp.lt.s32.totalorder %s27, 1
        %s452 = scalar_select %p451, %s27, 1
        %s453 = smul.addr %s450, 2
        %s454 = sadd.s32 %s452, %s453
        %s455 = smul.addr %s454, 8
        %s456 = scalar_lea.vmem %s4, %s455
        // Predicated region
        $region41: #{tpu_custom_call.1} parent=31 // pred_check
          %p457 = pneg %p139
        $region42: #{tpu_custom_call.1} parent=31 // pred_check_branch
          %459 = sbr.rel (%p457) target = $region44
        $region43: #{tpu_custom_call.1} parent=31 // pred_region
          %s460 = smul.u32 %s28, 2
          %s461 = sadd.s32 %s460, %s29
          %s463 = ssub.s32 128, 128
          %464 = vsyncadd %s445, %s463
          %s465 = smul.addr %s27, 2
          %s466 = sadd.s32 %s461, %s465
          %s467 = smul.addr %s466, 128
          %s468 = scalar_lea.hbm %s3, %s467
          %s470 = sshll.u32 %s448, 4
          %s471 = int_to_ptr.vmem [resolvable:$true] %s470
          %473 = dma.vmem_to_hbm [thread:$0]  %s471, 128, %s468, %s445
        $region44: #{tpu_custom_call.1} parent=31 // pred_fallthru
          _
        // Predicated region
        $region45: #{tpu_custom_call.1} parent=31 // pred_check
          %p474 = pneg %p167
        $region46: #{tpu_custom_call.1} parent=31 // pred_check_branch
          %476 = sbr.rel (%p474) target = $region48
        $region47: #{tpu_custom_call.1} parent=31 // pred_region
          _
        $region48: #{tpu_custom_call.1} parent=31 // pred_fallthru
          _
      $region32: #{tpu_custom_call.1} parent=5 // pred_fallthru
        _
      %p477 = scmp.le.s32.totalorder 2, %s17
      // Predicated region
      $region49: #{tpu_custom_call.1} parent=5 // pred_check
        %p478 = pneg %p477
      $region50: #{tpu_custom_call.1} parent=5 // pred_check_branch
        %480 = sbr.rel (%p478) target = $region52
      $region51: #{tpu_custom_call.1} parent=5 // pred_region
        %s481 = ssub.s32 %s17, 2
        // Predicated region
        $region53: #{tpu_custom_call.1} parent=51 // pred_check
          %p482 = pneg %p145
        $region54: #{tpu_custom_call.1} parent=51 // pred_check_branch
          %484 = sbr.rel (%p482) target = $region56
        $region55: #{tpu_custom_call.1} parent=51 // pred_region
          %s485 = sand.u32 %s130, 1
          %s486 = scalar_lea.sflag [#allocation4], %s485
          %s487 = sand.u32 %s130, 1
          %s488 = smul.addr %s487, 8
          %s489 = scalar_lea.vmem [#allocation5], %s488
          %490 = dma.done %s486, 128
        $region56: #{tpu_custom_call.1} parent=51 // pred_fallthru
          _
        // Predicated region
        $region57: #{tpu_custom_call.1} parent=51 // pred_check
          %p491 = pneg %p173
        $region58: #{tpu_custom_call.1} parent=51 // pred_check_branch
          %493 = sbr.rel (%p491) target = $region60
        $region59: #{tpu_custom_call.1} parent=51 // pred_region
          %p494 = scmp.lt.s32.totalorder %s31, 0
          %s495 = scalar_select %p494, %s31, 0
          %p496 = scmp.lt.s32.totalorder %s30, 1
          %s497 = scalar_select %p496, %s30, 1
          %s498 = smul.addr %s495, 2
          %s499 = sadd.s32 %s497, %s498
          %s500 = smul.addr %s499, 8
          %s501 = scalar_lea.vmem %s4, %s500
        $region60: #{tpu_custom_call.1} parent=51 // pred_fallthru
          _
      $region52: #{tpu_custom_call.1} parent=5 // pred_fallthru
        _
    $region6: #{tpu_custom_call.1} parent=1 // loop_footer
      %s21 = sadd.s32 1, %s17
    $region7: #{tpu_custom_call.1} parent=1 // loop_footer_branch
      %16 = sbr.rel target = $region3
    $region8: #{tpu_custom_call.1} parent=1 // loop_exit
      _
    %502 = vsyncpa [#allocation3], 1
    %s503 = scalar_lea.sflag [#allocation3], 1
    %504 = vsyncpa %s503, 1
    %505 = vsyncpa [#allocation4], 1
    %s506 = scalar_lea.sflag [#allocation4], 1
    %507 = vsyncpa %s506, 1

</llo_original>
